<compile_context>
chip_gen: v6e
topology: v6e:2x2x1
jax: 0.10.0
libtpu: 0.0.40
codegen_flags: <defaults>
</compile_context>

<pallas_src>
import math
import numpy as np
import jax
import jax.numpy as jnp
from jax import lax
from jax.experimental import pallas as pl
from jax.experimental.pallas import tpu as pltpu


def _make_gemm_kernel(bb, has_bias, precision):
    """GEMM(+bias) kernel; one grid step handles `bb` batch elements.

    p_ref: (bb, K, HoWo)    im2col patches, channel-major / tap-minor feature order
    w_ref: (Cout, K)        weights with the equal-lr scale folded in
    b_ref: (Cout, 1)        f32 bias column (only present when the module has bias)
    o_ref: (bb, Cout, HoWo) f32 output, spatial-last (lane dense for HoWo >= 128)
    """
    if has_bias:
        def kernel(p_ref, w_ref, b_ref, o_ref):
            w = w_ref[...]
            b = b_ref[...]
            for i in range(bb):                       # static unroll; bb is small
                acc = lax.dot_general(
                    w, p_ref[i],
                    dimension_numbers=(((1,), (0,)), ((), ())),
                    precision=precision,
                    preferred_element_type=jnp.float32)   # (Cout, HoWo)
                o_ref[i] = (acc + b).astype(o_ref.dtype)
    else:
        def kernel(p_ref, w_ref, o_ref):
            w = w_ref[...]
            for i in range(bb):
                acc = lax.dot_general(
                    w, p_ref[i],
                    dimension_numbers=(((1,), (0,)), ((), ())),
                    precision=precision,
                    preferred_element_type=jnp.float32)
                o_ref[i] = acc.astype(o_ref.dtype)
    return kernel


def _im2col_nchw(x, kh, kw, stride, padding):
    """Pure-data-movement im2col (XLA side): (B,Cin,H,W) -> (B, Cin*kh*kw, Ho*Wo).

    Feature ordering is channel-major / tap-minor: index = c*(kh*kw) + dy*kw + dx,
    which matches weight.reshape(Cout, Cin*kh*kw).  No arithmetic -> exact.
    """
    B, Cin, H, W = x.shape
    if padding > 0:
        x = jnp.pad(x, ((0, 0), (0, 0), (padding, padding), (padding, padding)))
    Hp, Wp = H + 2 * padding, W + 2 * padding
    Ho = (Hp - kh) // stride + 1
    Wo = (Wp - kw) // stride + 1
    if kh == 1 and kw == 1 and stride == 1:
        # 1x1 fast path: no copies, just a free reshape.
        return x.reshape(B, Cin, Ho * Wo), Ho, Wo
    taps = []
    for dy in range(kh):
        for dx in range(kw):
            taps.append(lax.slice(
                x,
                (0, 0, dy, dx),
                (B, Cin, dy + (Ho - 1) * stride + 1, dx + (Wo - 1) * stride + 1),
                (1, 1, stride, stride)))
    patches = jnp.stack(taps, axis=2)                 # (B, Cin, kh*kw, Ho, Wo)
    return patches.reshape(B, Cin * kh * kw, Ho * Wo), Ho, Wo


def _pick_batch_block(B, bytes_per_batch_elem):
    """Batch elements folded per grid step: amortize the ~0.35us per-step overhead,
    keep >= 2 grid steps when B >= 2 (megacore "parallel"), stay under a modest
    VMEM budget (Pallas double-buffers the input block)."""
    vmem_budget = 8 * 1024 * 1024
    bb = max(1, int(vmem_budget // max(int(bytes_per_batch_elem), 1)))
    if B >= 2:
        bb = min(bb, B // 2)
    bb = max(1, min(bb, B))
    while bb > 1 and B % bb:
        bb -= 1
    return bb


def equal_conv2d_pallas(x, weight, bias=None, *, stride=1, padding=0,
                        compute_dtype=None):
    """EqualConv2d forward.  x: (B, Cin, H, W) NCHW; weight: (Cout, Cin, kh, kw)."""
    B, Cin, H, W = x.shape
    Cout, Cin_w, kh, kw = weight.shape
    assert Cin_w == Cin
    scale = 1.0 / math.sqrt(Cin * kh * kw)
    K = Cin * kh * kw

    cdt = jnp.dtype(compute_dtype) if compute_dtype is not None else jnp.dtype(x.dtype)
    # Full-precision f32 MXU path so the f32 demo matches the reference to ~1e-5;
    # bf16 operands use the native bf16 MXU (2x rate, half the DMA bytes) with f32 acc.
    precision = lax.Precision.HIGHEST if cdt == jnp.dtype(jnp.float32) else None

    patches, Ho, Wo = _im2col_nchw(x.astype(cdt), kh, kw, stride, padding)
    HoWo = Ho * Wo

    # (Cout, Cin, kh, kw) -> (Cout, K), channel-major / tap-minor, equal-lr scale folded in.
    w_flat = (weight.astype(jnp.float32) * scale).reshape(Cout, K).astype(cdt)

    has_bias = bias is not None
    bb = _pick_batch_block(B, HoWo * K * cdt.itemsize + Cout * HoWo * 4)
    grid = (B // bb,)

    kernel = _make_gemm_kernel(bb, has_bias, precision)

    in_specs = [
        pl.BlockSpec((bb, K, HoWo), lambda g: (g, 0, 0)),
        pl.BlockSpec((Cout, K), lambda g: (0, 0)),
    ]
    args = [patches, w_flat]
    if has_bias:
        in_specs.append(pl.BlockSpec((Cout, 1), lambda g: (0, 0)))
        args.append(bias.reshape(Cout, 1).astype(jnp.float32))

    out_flat = pl.pallas_call(
        kernel,
        # f32 output to mirror the PyTorch module; switch to cdt if the surrounding
        # pipeline is bf16 end-to-end to halve writeback bytes.
        out_shape=jax.ShapeDtypeStruct((B, Cout, HoWo), jnp.float32),
        grid_spec=pltpu.PrefetchScalarGridSpec(
            num_scalar_prefetch=0,
            grid=grid,
            in_specs=in_specs,
            out_specs=pl.BlockSpec((bb, Cout, HoWo), lambda g: (g, 0, 0)),
        ),
        compiler_params=pltpu.CompilerParams(dimension_semantics=("parallel",)),
    )(*args)

    # Spatial-last output layout -> free reshape back to NCHW (no transpose).
    return out_flat.reshape(B, Cout, Ho, Wo)


def equal_conv2d_reference(x, weight, bias=None, *, stride=1, padding=0):
    """Pure-JAX reference mirroring F.conv2d(x, weight*scale, bias, stride, padding)."""
    Cout, Cin, kh, kw = weight.shape
    scale = 1.0 / math.sqrt(Cin * kh * kw)
    out = lax.conv_general_dilated(
        x.astype(jnp.float32), (weight * scale).astype(jnp.float32),
        window_strides=(stride, stride),
        padding=((padding, padding), (padding, padding)),
        dimension_numbers=("NCHW", "OIHW", "NCHW"),
        precision=lax.Precision.HIGHEST)
    if bias is not None:
        out = out + bias.reshape(1, Cout, 1, 1)
    return out


def _check(name, got, want, tol):
    got = np.asarray(got)
    want = np.asarray(want)
    if got.shape != want.shape:
        raise AssertionError(f"{name}: shape {got.shape} vs {want.shape}")
    if not np.allclose(got, want, rtol=tol, atol=tol):
        err = float(np.max(np.abs(got - want)))
        raise AssertionError(f"{name}: mismatch vs reference, max abs err={err} (tol={tol})")


if __name__ == "__main__":
    B, Cin, Cout, H, W = 2, 4, 8, 16, 16
    key = jax.random.PRNGKey(0)
    kx, k3, kb, k1 = jax.random.split(key, 4)
    x = jax.random.normal(kx, (B, Cin, H, W), jnp.float32)

    # Config A: 3x3, stride 1, padding 1, with bias (typical encoder usage), f32.
    w3 = jax.random.normal(k3, (Cout, Cin, 3, 3), jnp.float32)
    b3 = jax.random.normal(kb, (Cout,), jnp.float32)
    outA = jax.block_until_ready(equal_conv2d_pallas(x, w3, b3, stride=1, padding=1))
    refA = jax.block_until_ready(equal_conv2d_reference(x, w3, b3, stride=1, padding=1))
    assert outA.shape == (B, Cout, H, W), outA.shape
    _check("EqualConv2d 3x3 s1 p1 f32", outA, refA, tol=1e-5)

    # Config B: 1x1, stride 1, padding 0, no bias (fast path, no bias DMA).
    w1 = jax.random.normal(k1, (Cout, Cin, 1, 1), jnp.float32)
    outB = jax.block_until_ready(equal_conv2d_pallas(x, w1, None, stride=1, padding=0))
    refB = jax.block_until_ready(equal_conv2d_reference(x, w1, None, stride=1, padding=0))
    assert outB.shape == (B, Cout, H, W), outB.shape
    _check("EqualConv2d 1x1 s1 p0 f32", outB, refB, tol=1e-5)

    # Config C: 3x3, stride 2, padding 1, with bias (exercises the stride path).
    outC = jax.block_until_ready(equal_conv2d_pallas(x, w3, b3, stride=2, padding=1))
    refC = jax.block_until_ready(equal_conv2d_reference(x, w3, b3, stride=2, padding=1))
    assert outC.shape == (B, Cout, 8, 8), outC.shape
    _check("EqualConv2d 3x3 s2 p1 f32", outC, refC, tol=1e-5)

    # Config D: bf16 compute path (v6e/v7x fast path); looser tolerance vs f32 ref.
    outD = jax.block_until_ready(
        equal_conv2d_pallas(x, w3, b3, stride=1, padding=1, compute_dtype=jnp.bfloat16))
    _check("EqualConv2d 3x3 s1 p1 bf16", outD, refA, tol=3e-2)

    print("KERNEL_OK")
</pallas_src>

<mosaic_0001>
module attributes {stable_mosaic.version = 11 : i64} {
  func.func @kernel(%arg0: i32, %arg1: memref<1x36x256xf32, #tpu.memory_space<vmem>>, %arg2: memref<8x36xf32, #tpu.memory_space<vmem>>, %arg3: memref<8x1xf32, #tpu.memory_space<vmem>>, %arg4: memref<1x8x256xf32, #tpu.memory_space<vmem>>) attributes {dimension_semantics = [#tpu.dimension_semantics<parallel>], iteration_bounds = array<i64: 2>, scalar_prefetch = 0 : i64, scratch_operands = 0 : i64, tpu.core_type = #tpu.core_type<tc>, window_params = [{transform_indices = @transform_0, window_bounds = array<i64: 1, 36, 256>}, {pipeline_mode = #tpu.pipeline_mode<synchronous>, transform_indices = @transform_1, window_bounds = array<i64: 8, 36>}, {pipeline_mode = #tpu.pipeline_mode<synchronous>, transform_indices = @transform_2, window_bounds = array<i64: 8, 1>}, {transform_indices = @transform_3, window_bounds = array<i64: 1, 8, 256>}]} {
    %c0 = arith.constant 0 : index
    %c0_0 = arith.constant 0 : index
    %0 = vector.load %arg2[%c0, %c0_0] : memref<8x36xf32, #tpu.memory_space<vmem>>, vector<8x36xf32>
    %c0_1 = arith.constant 0 : index
    %c0_2 = arith.constant 0 : index
    %1 = vector.load %arg3[%c0_1, %c0_2] : memref<8x1xf32, #tpu.memory_space<vmem>>, vector<8x1xf32>
    %c0_3 = arith.constant 0 : index
    %c0_4 = arith.constant 0 : index
    %c0_5 = arith.constant 0 : index
    %2 = vector.load %arg1[%c0_3, %c0_4, %c0_5] : memref<1x36x256xf32, #tpu.memory_space<vmem>>, vector<1x36x256xf32>
    %3 = vector.shape_cast %2 : vector<1x36x256xf32> to vector<36x256xf32>
    %cst = arith.constant dense<0.000000e+00> : vector<8x256xf32>
    %4 = tpu.matmul %0, %3, %cst {dimension_numbers = #tpu.dot_dimension_numbers<[1], [0], [0], [1], [0, 0, 1, 1], [], []>, precision = #tpu.contract_precision<fp32>} : vector<8x36xf32>, vector<36x256xf32>, vector<8x256xf32> -> vector<8x256xf32>
    %5 = vector.broadcast %1 : vector<8x1xf32> to vector<8x256xf32>
    %6 = arith.addf %4, %5 : vector<8x256xf32>
    %c0_6 = arith.constant 0 : index
    %c0_7 = arith.constant 0 : index
    %c0_8 = arith.constant 0 : index
    %7 = vector.load %arg4[%c0_6, %c0_7, %c0_8] : memref<1x8x256xf32, #tpu.memory_space<vmem>>, vector<1x8x256xf32>
    %8 = vector.shape_cast %7 : vector<1x8x256xf32> to vector<8x256xf32>
    %9 = vector.shape_cast %6 : vector<8x256xf32> to vector<1x8x256xf32>
    tpu.vector_store %arg4[%c0_6, %c0_7, %c0_8], %9 {strides = array<i32>} : memref<1x8x256xf32, #tpu.memory_space<vmem>>, vector<1x8x256xf32>,
    return
  }
  func.func @transform_0(%arg0: i32) -> (i32, i32, i32) {
    %c0_i32 = arith.constant 0 : i32
    %c0_i32_0 = arith.constant 0 : i32
    %c0_i32_1 = arith.constant 0 : i32
    return %arg0, %c0_i32, %c0_i32_0 : i32, i32, i32
  }
  func.func @transform_1(%arg0: i32) -> (i32, i32) {
    %c0_i32 = arith.constant 0 : i32
    %c0_i32_0 = arith.constant 0 : i32
    %c0_i32_1 = arith.constant 0 : i32
    return %c0_i32, %c0_i32_0 : i32, i32
  }
  func.func @transform_2(%arg0: i32) -> (i32, i32) {
    %c0_i32 = arith.constant 0 : i32
    %c0_i32_0 = arith.constant 0 : i32
    %c0_i32_1 = arith.constant 0 : i32
    return %c0_i32, %c0_i32_0 : i32, i32
  }
  func.func @transform_3(%arg0: i32) -> (i32, i32, i32) {
    %c0_i32 = arith.constant 0 : i32
    %c0_i32_0 = arith.constant 0 : i32
    %c0_i32_1 = arith.constant 0 : i32
    return %arg0, %c0_i32, %c0_i32_0 : i32, i32, i32
  }
}

</mosaic_0001>

<llo_original>
// kernel: tpu_custom_call.1
$region0: #{tpu_custom_call.1}
  #allocation0 [shape = 'u32[]', space=smem, size = 0x4, offset = 0x4, fixed_abs, tag = 'smem constant byte address 0x4 - core index']
  #allocation1 [shape = 'u32[144,128]{1,0:T(1,128)}', space=vmem, size = 0x12000, scoped, tag = 'internal scratch']
  %s0 = inlined_call_operand.vmem [shape: f32[2,36,256], index: 0, kind: input, shape index: {}]
  %s1 = inlined_call_operand.vmem [shape: f32[8,36], index: 1, kind: input, shape index: {}]
  %s2 = inlined_call_operand.vmem [shape: f32[8,1], index: 2, kind: input, shape index: {}]
  %s3 = inlined_call_operand.hbm [shape: f32[2,8,256], index: 3, kind: output, shape index: {}]
  %s4 = sld [smem:[#allocation0]]
  $region45: #{tpu_custom_call.1} parent=0
    _
  %s6 = ssub.s32 1, %s4
  %s7 = scalar_select 0, %s6, %s4
  $region1: #{tpu_custom_call.1} parent=0
    #allocation2 [shape = 'u8[16384]{0}', space=vmem, size = 0x4000, scoped, tag = 'output window, operand 0']
    #allocation3 [shape = 's32[2]{0}', space=sflag, size = 0x8, scoped, tag = 'scoped memory for tpu_custom_call.1']
    %8 = vsyncpa [#allocation3], 0
    %s9 = scalar_lea.sflag [#allocation3], 1
    %10 = vsyncpa %s9, 0
    loop: start=0, step=1, limit=4
    $region2: #{tpu_custom_call.1} parent=1 // loop_pre_header
      _
    $region3: #{tpu_custom_call.1} parent=1 // loop_header
      %s12 = sphi 0, %s16
      %p13 = scmp.ge.s32.totalorder %s12, 4
      %s22 = sphi 0, %s24
      %s25 = sphi 0, %s22
      %s26 = sphi 0, %s25
      %s42 = sphi 0, %s26
      %s46 = sphi 0, %s46
      %s48 = sphi 0, %s46
      %s49 = sphi 0, %s48
      %s63 = sphi 0, %s49
      %s67 = sphi 0, %s67
      %s69 = sphi 0, %s67
      %s70 = sphi 0, %s69
      %s84 = sphi 0, %s70
      %s90 = sphi 0, %s92
      %s93 = sphi 0, %s90
      %s94 = sphi 0, %s93
      %s110 = sphi 0, %s94
    $region4: #{tpu_custom_call.1} parent=1 // loop_header_branch
      %15 = sbr.rel (%p13) target = $region8
    $region5: #{tpu_custom_call.1} parent=1 // loop_body
      %s17 = ssub.s32 %s12, 1
      %s18 = ssub.s32 %s12, 2
      %s19 = sadd.s32 %s12, 1
      %s20 = ssub.s32 %s12, %s19
      %p21 = scmp.eq.s32.totalorder %s20, 0
      %s23 = sadd.s32 %s22, 1
      %s24 = scalar_select %p21, %s22, %s23
      %p27 = pneg %p21
      %p28 = scmp.eq.s32.totalorder %s12, 1
      %p29 = por %p27, %p28
      %p30 = scmp.ne.s32.totalorder %s22, %s25
      %p31 = scmp.eq.s32.totalorder %s12, 0
      %p32 = por %p30, %p31
      %p33 = scmp.ne.s32.totalorder %s22, %s25
      %p34 = scmp.eq.s32.totalorder %s17, 1
      %p35 = por %p33, %p34
      %p36 = scmp.ne.s32.totalorder %s25, %s26
      %p37 = scmp.eq.s32.totalorder %s17, 0
      %p38 = por %p36, %p37
      %p39 = scmp.ne.s32.totalorder %s25, %s26
      %p40 = scmp.eq.s32.totalorder %s18, 1
      %p41 = por %p39, %p40
      %p43 = scmp.ne.s32.totalorder %s26, %s42
      %p44 = scmp.eq.s32.totalorder %s18, 0
      %p45 = por %p43, %p44
      %s47 = sadd.s32 %s46, 1
      %p50 = scmp.eq.s32.totalorder %s12, 1
      %p51 = scmp.ne.s32.totalorder %s46, %s48
      %p52 = scmp.eq.s32.totalorder %s12, 0
      %p53 = por %p51, %p52
      %p54 = scmp.ne.s32.totalorder %s46, %s48
      %p55 = scmp.eq.s32.totalorder %s17, 1
      %p56 = por %p54, %p55
      %p57 = scmp.ne.s32.totalorder %s48, %s49
      %p58 = scmp.eq.s32.totalorder %s17, 0
      %p59 = por %p57, %p58
      %p60 = scmp.ne.s32.totalorder %s48, %s49
      %p61 = scmp.eq.s32.totalorder %s18, 1
      %p62 = por %p60, %p61
      %p64 = scmp.ne.s32.totalorder %s49, %s63
      %p65 = scmp.eq.s32.totalorder %s18, 0
      %p66 = por %p64, %p65
      %s68 = sadd.s32 %s67, 1
      %p71 = scmp.eq.s32.totalorder %s12, 1
      %p72 = scmp.ne.s32.totalorder %s67, %s69
      %p73 = scmp.eq.s32.totalorder %s12, 0
      %p74 = por %p72, %p73
      %p75 = scmp.ne.s32.totalorder %s67, %s69
      %p76 = scmp.eq.s32.totalorder %s17, 1
      %p77 = por %p75, %p76
      %p78 = scmp.ne.s32.totalorder %s69, %s70
      %p79 = scmp.eq.s32.totalorder %s17, 0
      %p80 = por %p78, %p79
      %p81 = scmp.ne.s32.totalorder %s69, %s70
      %p82 = scmp.eq.s32.totalorder %s18, 1
      %p83 = por %p81, %p82
      %p85 = scmp.ne.s32.totalorder %s70, %s84
      %p86 = scmp.eq.s32.totalorder %s18, 0
      %p87 = por %p85, %p86
      %s88 = ssub.s32 %s12, %s19
      %p89 = scmp.eq.s32.totalorder %s88, 0
      %s91 = sadd.s32 %s90, 1
      %s92 = scalar_select %p89, %s90, %s91
      %p95 = pneg %p89
      %p96 = scmp.eq.s32.totalorder %s12, 1
      %p97 = por %p95, %p96
      %p98 = scmp.ne.s32.totalorder %s90, %s93
      %p99 = scmp.eq.s32.totalorder %s12, 0
      %p100 = por %p98, %p99
      %p101 = scmp.ne.s32.totalorder %s90, %s93
      %p102 = scmp.eq.s32.totalorder %s17, 1
      %p103 = por %p101, %p102
      %p104 = scmp.ne.s32.totalorder %s93, %s94
      %p105 = scmp.eq.s32.totalorder %s17, 0
      %p106 = por %p104, %p105
      %p107 = scmp.ne.s32.totalorder %s93, %s94
      %p108 = scmp.eq.s32.totalorder %s18, 1
      %p109 = por %p107, %p108
      %p111 = scmp.ne.s32.totalorder %s94, %s110
      %p112 = scmp.eq.s32.totalorder %s18, 0
      %p113 = por %p111, %p112
      %p114 = scmp.le.s32.totalorder 1, %s12
      %p115 = scmp.lt.s32.totalorder %s12, 3
      %p116 = pnand %p114, %p115
      %p117 = pneg %p116
      // Predicated region
      $region9: #{tpu_custom_call.1} parent=5 // pred_check
        _
      $region10: #{tpu_custom_call.1} parent=5 // pred_check_branch
        %119 = sbr.rel (%p116) target = $region12
      $region11: #{tpu_custom_call.1} parent=5 // pred_region
        %s120 = ssub.s32 %s12, 1
        // Predicated region
        $region13: #{tpu_custom_call.1} parent=11 // pred_check
          %p121 = pneg %p59
        $region14: #{tpu_custom_call.1} parent=11 // pred_check_branch
          %123 = sbr.rel (%p121) target = $region16
        $region15: #{tpu_custom_call.1} parent=11 // pred_region
          _
        $region16: #{tpu_custom_call.1} parent=11 // pred_fallthru
          _
        // Predicated region
        $region17: #{tpu_custom_call.1} parent=11 // pred_check
          %p124 = pneg %p80
        $region18: #{tpu_custom_call.1} parent=11 // pred_check_branch
          %126 = sbr.rel (%p124) target = $region20
        $region19: #{tpu_custom_call.1} parent=11 // pred_region
          _
        $region20: #{tpu_custom_call.1} parent=11 // pred_fallthru
          _
      $region12: #{tpu_custom_call.1} parent=5 // pred_fallthru
        _
      %p127 = scmp.lt.s32.totalorder %s12, 2
      // Predicated region
      $region21: #{tpu_custom_call.1} parent=5 // pred_check
        %p128 = pneg %p127
      $region22: #{tpu_custom_call.1} parent=5 // pred_check_branch
        %130 = sbr.rel (%p128) target = $region24
      $region23: #{tpu_custom_call.1} parent=5 // pred_region
        // Predicated region
        $region25: #{tpu_custom_call.1} parent=23 // pred_check
          %p131 = pneg %p32
        $region26: #{tpu_custom_call.1} parent=23 // pred_check_branch
          %133 = sbr.rel (%p131) target = $region28
        $region27: #{tpu_custom_call.1} parent=23 // pred_region
          %p134 = scmp.lt.s32.totalorder %s12, 1
          %s135 = scalar_select %p134, %s12, 1
          %s136 = smul.addr %s135, 10
          %s137 = smul.addr %s136, 8
          %s138 = scalar_lea.vmem %s0, %s137
        $region28: #{tpu_custom_call.1} parent=23 // pred_fallthru
          _
      $region24: #{tpu_custom_call.1} parent=5 // pred_fallthru
        _
      %p139 = scmp.le.s32.totalorder 1, %s12
      %p140 = scmp.lt.s32.totalorder %s12, 3
      %p141 = pnand %p139, %p140
      %p142 = pneg %p141
      // Predicated region
      $region29: #{tpu_custom_call.1} parent=5 // pred_check
        _
      $region30: #{tpu_custom_call.1} parent=5 // pred_check_branch
        %144 = sbr.rel (%p141) target = $region32
      $region31: #{tpu_custom_call.1} parent=5 // pred_region
        %s145 = ssub.s32 %s12, 1
        %p146 = scmp.lt.s32.totalorder %s17, 1
        %s147 = scalar_select %p146, %s17, 1
        %s148 = smul.addr %s147, 10
        %s149 = smul.addr %s148, 8
        %s150 = scalar_lea.vmem %s0, %s149
        %p151 = pneg %p38
        %p152 = pneg %p35
        %p153 = pneg %p59
        %p154 = pneg %p56
        %p155 = pneg %p80
        %p156 = pneg %p77
        %p157 = pneg %p106
        %p158 = pneg %p103
        %s159 = sand.u32 %s93, 1
        %s160 = scalar_lea.sflag [#allocation3], %s159
        %s161 = sand.u32 %s93, 1
        %s162 = smul.addr %s161, 16
        %s163 = scalar_lea.vmem [#allocation2], %s162
        %p164 = scmp.lt.s32.totalorder %s17, 1
        %s165 = scalar_select %p164, %s17, 1
        %s166 = smul.addr %s165, 10
        %s167 = smul.addr %s166, 8
        %s168 = scalar_lea.vmem %s0, %s167
        %v169 = vld [vmem:[%s1] sm:$0xff]
        %v170 = vld [vmem:[%s2] sm:$0xff]
        %v171 = vld [vmem:[%s168] sm:$0xff]
        %v172 = vld [vmem:[%s168 + $0x8] sm:$0xff]
        %v173 = vld [vmem:[%s168 + $0x10] sm:$0xff]
        %v174 = vld [vmem:[%s168 + $0x18] sm:$0xff]
        %v175 = vld [vmem:[%s168 + $0x20] sm:$0xff]
        %v176 = vld [vmem:[%s168 + $0x28] sm:$0xff]
        %v177 = vld [vmem:[%s168 + $0x30] sm:$0xff]
        %v178 = vld [vmem:[%s168 + $0x38] sm:$0xff]
        %v179 = vld [vmem:[%s168 + $0x40] sm:$0xf]
        %v180 = vld [vmem:[%s168 + $0x48] sm:$0xf]
        %182 = vset.pattern.permute.xlu0 0
        %183 = vperm.xlu0 %182, %v170
        %v184 = vpop.permute.xlu0 %183
        %vm186 = vcmask 293888
        %v188 = vsel %vm186, %v169, 0
        %vm190 = vcmask 1043456
        %v192 = vsel %vm190, %v179, 0
        %v195 = vsel %vm190, %v180, 0
        %197 = vmatprep.subr.mxu0 0.0
        %198 = vmatpush1.msra.mxu0 0.0
        %199 = vmatprep.subr.mxu0 0.0
        %200 = vmatpush1.msra.mxu0 0.0
        %201 = vmatprep.subr.mxu0 0.0
        %202 = vmatpush1.msra.mxu0 0.0
        %203 = vmatprep.subr.mxu0 0.0
        %204 = vmatpush1.msra.mxu0 0.0
        %205 = vmatprep.subr.mxu0 0.0
        %206 = vmatpush1.msra.mxu0 0.0
        %207 = vmatprep.subr.mxu0 0.0
        %208 = vmatpush1.msra.mxu0 0.0
        %209 = vmatprep.subr.mxu0 0.0
        %210 = vmatpush1.msra.mxu0 0.0
        %211 = vmatprep.subr.mxu0 0.0
        %212 = vmatpush1.msra.mxu0 0.0
        %213 = vmatprep.subr.mxu0 0.0
        %214 = vmatpush1.msra.mxu0 0.0
        %215 = vmatprep.subr.mxu0 0.0
        %216 = vmatpush1.msra.mxu0 0.0
        %217 = vmatprep.subr.mxu0 0.0
        %218 = vmatpush1.msra.mxu0 0.0
        %v219 = vand.u32 %v195, 4294901760
        %220 = vmatprep.subr.mxu0 %v219
        %v221 = vand.u32 %v192, 4294901760
        %222 = vmatpush1.msra.mxu0 %v221
        %v223 = vand.u32 %v178, 4294901760
        %224 = vmatprep.subr.mxu0 %v223
        %v225 = vand.u32 %v177, 4294901760
        %226 = vmatpush1.msra.mxu0 %v225
        %v227 = vand.u32 %v176, 4294901760
        %228 = vmatprep.subr.mxu0 %v227
        %v229 = vand.u32 %v175, 4294901760
        %230 = vmatpush1.msra.mxu0 %v229
        %v231 = vand.u32 %v174, 4294901760
        %232 = vmatprep.subr.mxu0 %v231
        %v233 = vand.u32 %v173, 4294901760
        %234 = vmatpush1.msra.mxu0 %v233
        %v235 = vand.u32 %v172, 4294901760
        %236 = vmatprep.subr.mxu0 %v235
        %v237 = vand.u32 %v171, 4294901760
        %238 = vmatpush1.msra.mxu0 %v237
        %239 = vmatprep.subr.mxu0 0.0
        %240 = vmatpush2.msra.mxu0 0.0
        %241 = vmatprep.subr.mxu0 0.0
        %242 = vmatpush2.msra.mxu0 0.0
        %243 = vmatprep.subr.mxu0 0.0
        %244 = vmatpush2.msra.mxu0 0.0
        %245 = vmatprep.subr.mxu0 0.0
        %246 = vmatpush2.msra.mxu0 0.0
        %247 = vmatprep.subr.mxu0 0.0
        %248 = vmatpush2.msra.mxu0 0.0
        %249 = vmatprep.subr.mxu0 0.0
        %250 = vmatpush2.msra.mxu0 0.0
        %251 = vmatprep.subr.mxu0 0.0
        %252 = vmatpush2.msra.mxu0 0.0
        %253 = vmatprep.subr.mxu0 0.0
        %254 = vmatpush2.msra.mxu0 0.0
        %255 = vmatprep.subr.mxu0 0.0
        %256 = vmatpush2.msra.mxu0 0.0
        %257 = vmatprep.subr.mxu0 0.0
        %258 = vmatpush2.msra.mxu0 0.0
        %259 = vmatprep.subr.mxu0 0.0
        %260 = vmatpush2.msra.mxu0 0.0
        %261 = vmatprep.subr.mxu0 0.0
        %262 = vmatpush2.msra.mxu0 0.0
        %263 = vmatprep.subr.mxu0 0.0
        %264 = vmatpush2.msra.mxu0 0.0
        %265 = vmatprep.subr.mxu0 0.0
        %266 = vmatpush2.msra.mxu0 0.0
        %267 = vmatprep.subr.mxu0 0.0
        %268 = vmatpush2.msra.mxu0 0.0
        %269 = vmatprep.subr.mxu0 0.0
        %270 = vmatpush2.msra.mxu0 0.0
        %271 = vmatprep.mubr.f32.mxu0 0.0
        %v272 = vand.u32 %v188, 4294901760
        %v273 = vsub.f32 %v188, %v272
        %v274 = vand.u32 %v273, 4294901760
        %v275 = vsub.f32 %v273, %v274
        %v276 = vand.u32 %v275, 4294901760
        %277 = vmatmul.mubr.f32.gmra.mxu0 %v276
        %v278 = vpop.f32.mrf.mxu0
        %v279 = vadd.f32 %v184, %v278
        %v280 = vpop.f32.mrf.mxu0
        %v281 = vadd.f32 %v184, %v280
        %282 = vdwg.mxu0
        %283 = vmatprep.subr.mxu0 0.0
        %284 = vmatpush1.msra.mxu0 0.0
        %285 = vmatprep.subr.mxu0 0.0
        %286 = vmatpush1.msra.mxu0 0.0
        %287 = vmatprep.subr.mxu0 0.0
        %288 = vmatpush1.msra.mxu0 0.0
        %289 = vmatprep.subr.mxu0 0.0
        %290 = vmatpush1.msra.mxu0 0.0
        %291 = vmatprep.subr.mxu0 0.0
        %292 = vmatpush1.msra.mxu0 0.0
        %293 = vmatprep.subr.mxu0 0.0
        %294 = vmatpush1.msra.mxu0 0.0
        %295 = vmatprep.subr.mxu0 0.0
        %296 = vmatpush1.msra.mxu0 0.0
        %297 = vmatprep.subr.mxu0 0.0
        %298 = vmatpush1.msra.mxu0 0.0
        %299 = vmatprep.subr.mxu0 0.0
        %300 = vmatpush1.msra.mxu0 0.0
        %301 = vmatprep.subr.mxu0 0.0
        %302 = vmatpush1.msra.mxu0 0.0
        %303 = vmatprep.subr.mxu0 0.0
        %304 = vmatpush1.msra.mxu0 0.0
        %v305 = vand.u32 %v195, 4294901760
        %v306 = vsub.f32 %v195, %v305
        %v307 = vand.u32 %v306, 4294901760
        %v308 = vsub.f32 %v306, %v307
        %v309 = vand.u32 %v308, 4294901760
        %310 = vmatprep.subr.mxu0 %v309
        %v311 = vand.u32 %v192, 4294901760
        %v312 = vsub.f32 %v192, %v311
        %v313 = vand.u32 %v312, 4294901760
        %v314 = vsub.f32 %v312, %v313
        %v315 = vand.u32 %v314, 4294901760
        %316 = vmatpush1.msra.mxu0 %v315
        %v317 = vand.u32 %v178, 4294901760
        %v318 = vsub.f32 %v178, %v317
        %v319 = vand.u32 %v318, 4294901760
        %v320 = vsub.f32 %v318, %v319
        %v321 = vand.u32 %v320, 4294901760
        %322 = vmatprep.subr.mxu0 %v321
        %v323 = vand.u32 %v177, 4294901760
        %v324 = vsub.f32 %v177, %v323
        %v325 = vand.u32 %v324, 4294901760
        %v326 = vsub.f32 %v324, %v325
        %v327 = vand.u32 %v326, 4294901760
        %328 = vmatpush1.msra.mxu0 %v327
        %v329 = vand.u32 %v176, 4294901760
        %v330 = vsub.f32 %v176, %v329
        %v331 = vand.u32 %v330, 4294901760
        %v332 = vsub.f32 %v330, %v331
        %v333 = vand.u32 %v332, 4294901760
        %334 = vmatprep.subr.mxu0 %v333
        %v335 = vand.u32 %v175, 4294901760
        %v336 = vsub.f32 %v175, %v335
        %v337 = vand.u32 %v336, 4294901760
        %v338 = vsub.f32 %v336, %v337
        %v339 = vand.u32 %v338, 4294901760
        %340 = vmatpush1.msra.mxu0 %v339
        %v341 = vand.u32 %v174, 4294901760
        %v342 = vsub.f32 %v174, %v341
        %v343 = vand.u32 %v342, 4294901760
        %v344 = vsub.f32 %v342, %v343
        %v345 = vand.u32 %v344, 4294901760
        %346 = vmatprep.subr.mxu0 %v345
        %v347 = vand.u32 %v173, 4294901760
        %v348 = vsub.f32 %v173, %v347
        %v349 = vand.u32 %v348, 4294901760
        %v350 = vsub.f32 %v348, %v349
        %v351 = vand.u32 %v350, 4294901760
        %352 = vmatpush1.msra.mxu0 %v351
        %v353 = vand.u32 %v172, 4294901760
        %v354 = vsub.f32 %v172, %v353
        %v355 = vand.u32 %v354, 4294901760
        %v356 = vsub.f32 %v354, %v355
        %v357 = vand.u32 %v356, 4294901760
        %358 = vmatprep.subr.mxu0 %v357
        %v359 = vand.u32 %v171, 4294901760
        %v360 = vsub.f32 %v171, %v359
        %v361 = vand.u32 %v360, 4294901760
        %v362 = vsub.f32 %v360, %v361
        %v363 = vand.u32 %v362, 4294901760
        %364 = vmatpush1.msra.mxu0 %v363
        %365 = vmatprep.subr.mxu0 0.0
        %366 = vmatpush2.msra.mxu0 0.0
        %367 = vmatprep.subr.mxu0 0.0
        %368 = vmatpush2.msra.mxu0 0.0
        %369 = vmatprep.subr.mxu0 0.0
        %370 = vmatpush2.msra.mxu0 0.0
        %371 = vmatprep.subr.mxu0 0.0
        %372 = vmatpush2.msra.mxu0 0.0
        %373 = vmatprep.subr.mxu0 0.0
        %374 = vmatpush2.msra.mxu0 0.0
        %375 = vmatprep.subr.mxu0 0.0
        %376 = vmatpush2.msra.mxu0 0.0
        %377 = vmatprep.subr.mxu0 0.0
        %378 = vmatpush2.msra.mxu0 0.0
        %379 = vmatprep.subr.mxu0 0.0
        %380 = vmatpush2.msra.mxu0 0.0
        %381 = vmatprep.subr.mxu0 0.0
        %382 = vmatpush2.msra.mxu0 0.0
        %383 = vmatprep.subr.mxu0 0.0
        %384 = vmatpush2.msra.mxu0 0.0
        %385 = vmatprep.subr.mxu0 0.0
        %386 = vmatpush2.msra.mxu0 0.0
        %387 = vmatprep.subr.mxu0 0.0
        %388 = vmatpush2.msra.mxu0 0.0
        %389 = vmatprep.subr.mxu0 0.0
        %390 = vmatpush2.msra.mxu0 0.0
        %391 = vmatprep.subr.mxu0 0.0
        %392 = vmatpush2.msra.mxu0 0.0
        %393 = vmatprep.subr.mxu0 0.0
        %394 = vmatpush2.msra.mxu0 0.0
        %395 = vmatprep.subr.mxu0 0.0
        %396 = vmatpush2.msra.mxu0 0.0
        %397 = vmatprep.mubr.f32.mxu0 0.0
        %v398 = vand.u32 %v188, 4294901760
        %399 = vmatmul.mubr.f32.gmra.mxu0 %v398
        %v400 = vpop.f32.mrf.mxu0
        %v401 = vadd.f32 %v279, %v400
        %v402 = vpop.f32.mrf.mxu0
        %v403 = vadd.f32 %v281, %v402
        %404 = vdwg.mxu0
        %405 = vmatprep.subr.mxu0 0.0
        %406 = vmatpush1.msra.mxu0 0.0
        %407 = vmatprep.subr.mxu0 0.0
        %408 = vmatpush1.msra.mxu0 0.0
        %409 = vmatprep.subr.mxu0 0.0
        %410 = vmatpush1.msra.mxu0 0.0
        %411 = vmatprep.subr.mxu0 0.0
        %412 = vmatpush1.msra.mxu0 0.0
        %413 = vmatprep.subr.mxu0 0.0
        %414 = vmatpush1.msra.mxu0 0.0
        %415 = vmatprep.subr.mxu0 0.0
        %416 = vmatpush1.msra.mxu0 0.0
        %417 = vmatprep.subr.mxu0 0.0
        %418 = vmatpush1.msra.mxu0 0.0
        %419 = vmatprep.subr.mxu0 0.0
        %420 = vmatpush1.msra.mxu0 0.0
        %421 = vmatprep.subr.mxu0 0.0
        %422 = vmatpush1.msra.mxu0 0.0
        %423 = vmatprep.subr.mxu0 0.0
        %424 = vmatpush1.msra.mxu0 0.0
        %425 = vmatprep.subr.mxu0 0.0
        %426 = vmatpush1.msra.mxu0 0.0
        %v427 = vand.u32 %v195, 4294901760
        %v428 = vsub.f32 %v195, %v427
        %429 = vmatprep.subr.mxu0 %v428
        %v430 = vand.u32 %v192, 4294901760
        %v431 = vsub.f32 %v192, %v430
        %432 = vmatpush1.msra.mxu0 %v431
        %v433 = vand.u32 %v178, 4294901760
        %v434 = vsub.f32 %v178, %v433
        %435 = vmatprep.subr.mxu0 %v434
        %v436 = vand.u32 %v177, 4294901760
        %v437 = vsub.f32 %v177, %v436
        %438 = vmatpush1.msra.mxu0 %v437
        %v439 = vand.u32 %v176, 4294901760
        %v440 = vsub.f32 %v176, %v439
        %441 = vmatprep.subr.mxu0 %v440
        %v442 = vand.u32 %v175, 4294901760
        %v443 = vsub.f32 %v175, %v442
        %444 = vmatpush1.msra.mxu0 %v443
        %v445 = vand.u32 %v174, 4294901760
        %v446 = vsub.f32 %v174, %v445
        %447 = vmatprep.subr.mxu0 %v446
        %v448 = vand.u32 %v173, 4294901760
        %v449 = vsub.f32 %v173, %v448
        %450 = vmatpush1.msra.mxu0 %v449
        %v451 = vand.u32 %v172, 4294901760
        %v452 = vsub.f32 %v172, %v451
        %453 = vmatprep.subr.mxu0 %v452
        %v454 = vand.u32 %v171, 4294901760
        %v455 = vsub.f32 %v171, %v454
        %456 = vmatpush1.msra.mxu0 %v455
        %457 = vmatprep.subr.mxu0 0.0
        %458 = vmatpush2.msra.mxu0 0.0
        %459 = vmatprep.subr.mxu0 0.0
        %460 = vmatpush2.msra.mxu0 0.0
        %461 = vmatprep.subr.mxu0 0.0
        %462 = vmatpush2.msra.mxu0 0.0
        %463 = vmatprep.subr.mxu0 0.0
        %464 = vmatpush2.msra.mxu0 0.0
        %465 = vmatprep.subr.mxu0 0.0
        %466 = vmatpush2.msra.mxu0 0.0
        %467 = vmatprep.subr.mxu0 0.0
        %468 = vmatpush2.msra.mxu0 0.0
        %469 = vmatprep.subr.mxu0 0.0
        %470 = vmatpush2.msra.mxu0 0.0
        %471 = vmatprep.subr.mxu0 0.0
        %472 = vmatpush2.msra.mxu0 0.0
        %473 = vmatprep.subr.mxu0 0.0
        %474 = vmatpush2.msra.mxu0 0.0
        %475 = vmatprep.subr.mxu0 0.0
        %476 = vmatpush2.msra.mxu0 0.0
        %477 = vmatprep.subr.mxu0 0.0
        %478 = vmatpush2.msra.mxu0 0.0
        %479 = vmatprep.subr.mxu0 0.0
        %480 = vmatpush2.msra.mxu0 0.0
        %481 = vmatprep.subr.mxu0 0.0
        %482 = vmatpush2.msra.mxu0 0.0
        %483 = vmatprep.subr.mxu0 0.0
        %484 = vmatpush2.msra.mxu0 0.0
        %485 = vmatprep.subr.mxu0 0.0
        %486 = vmatpush2.msra.mxu0 0.0
        %487 = vmatprep.subr.mxu0 0.0
        %488 = vmatpush2.msra.mxu0 0.0
        %489 = vmatprep.mubr.f32.mxu0 0.0
        %v490 = vand.u32 %v188, 4294901760
        %v491 = vsub.f32 %v188, %v490
        %492 = vmatmul.mubr.f32.gmra.mxu0 %v491
        %v493 = vpop.f32.mrf.mxu0
        %v494 = vadd.f32 %v401, %v493
        %v495 = vpop.f32.mrf.mxu0
        %v496 = vadd.f32 %v403, %v495
        %497 = vdwg.mxu0
        %498 = vmatprep.subr.mxu0 0.0
        %499 = vmatpush1.msra.mxu0 0.0
        %500 = vmatprep.subr.mxu0 0.0
        %501 = vmatpush1.msra.mxu0 0.0
        %502 = vmatprep.subr.mxu0 0.0
        %503 = vmatpush1.msra.mxu0 0.0
        %504 = vmatprep.subr.mxu0 0.0
        %505 = vmatpush1.msra.mxu0 0.0
        %506 = vmatprep.subr.mxu0 0.0
        %507 = vmatpush1.msra.mxu0 0.0
        %508 = vmatprep.subr.mxu0 0.0
        %509 = vmatpush1.msra.mxu0 0.0
        %510 = vmatprep.subr.mxu0 0.0
        %511 = vmatpush1.msra.mxu0 0.0
        %512 = vmatprep.subr.mxu0 0.0
        %513 = vmatpush1.msra.mxu0 0.0
        %514 = vmatprep.subr.mxu0 0.0
        %515 = vmatpush1.msra.mxu0 0.0
        %516 = vmatprep.subr.mxu0 0.0
        %517 = vmatpush1.msra.mxu0 0.0
        %518 = vmatprep.subr.mxu0 0.0
        %519 = vmatpush1.msra.mxu0 0.0
        %v520 = vand.u32 %v195, 4294901760
        %521 = vmatprep.subr.mxu0 %v520
        %v522 = vand.u32 %v192, 4294901760
        %523 = vmatpush1.msra.mxu0 %v522
        %v524 = vand.u32 %v178, 4294901760
        %525 = vmatprep.subr.mxu0 %v524
        %v526 = vand.u32 %v177, 4294901760
        %527 = vmatpush1.msra.mxu0 %v526
        %v528 = vand.u32 %v176, 4294901760
        %529 = vmatprep.subr.mxu0 %v528
        %v530 = vand.u32 %v175, 4294901760
        %531 = vmatpush1.msra.mxu0 %v530
        %v532 = vand.u32 %v174, 4294901760
        %533 = vmatprep.subr.mxu0 %v532
        %v534 = vand.u32 %v173, 4294901760
        %535 = vmatpush1.msra.mxu0 %v534
        %v536 = vand.u32 %v172, 4294901760
        %537 = vmatprep.subr.mxu0 %v536
        %v538 = vand.u32 %v171, 4294901760
        %539 = vmatpush1.msra.mxu0 %v538
        %540 = vmatprep.subr.mxu0 0.0
        %541 = vmatpush2.msra.mxu0 0.0
        %542 = vmatprep.subr.mxu0 0.0
        %543 = vmatpush2.msra.mxu0 0.0
        %544 = vmatprep.subr.mxu0 0.0
        %545 = vmatpush2.msra.mxu0 0.0
        %546 = vmatprep.subr.mxu0 0.0
        %547 = vmatpush2.msra.mxu0 0.0
        %548 = vmatprep.subr.mxu0 0.0
        %549 = vmatpush2.msra.mxu0 0.0
        %550 = vmatprep.subr.mxu0 0.0
        %551 = vmatpush2.msra.mxu0 0.0
        %552 = vmatprep.subr.mxu0 0.0
        %553 = vmatpush2.msra.mxu0 0.0
        %554 = vmatprep.subr.mxu0 0.0
        %555 = vmatpush2.msra.mxu0 0.0
        %556 = vmatprep.subr.mxu0 0.0
        %557 = vmatpush2.msra.mxu0 0.0
        %558 = vmatprep.subr.mxu0 0.0
        %559 = vmatpush2.msra.mxu0 0.0
        %560 = vmatprep.subr.mxu0 0.0
        %561 = vmatpush2.msra.mxu0 0.0
        %562 = vmatprep.subr.mxu0 0.0
        %563 = vmatpush2.msra.mxu0 0.0
        %564 = vmatprep.subr.mxu0 0.0
        %565 = vmatpush2.msra.mxu0 0.0
        %566 = vmatprep.subr.mxu0 0.0
        %567 = vmatpush2.msra.mxu0 0.0
        %568 = vmatprep.subr.mxu0 0.0
        %569 = vmatpush2.msra.mxu0 0.0
        %570 = vmatprep.subr.mxu0 0.0
        %571 = vmatpush2.msra.mxu0 0.0
        %572 = vmatprep.mubr.f32.mxu0 0.0
        %v573 = vand.u32 %v188, 4294901760
        %v574 = vsub.f32 %v188, %v573
        %v575 = vand.u32 %v574, 4294901760
        %576 = vmatmul.mubr.f32.gmra.mxu0 %v575
        %v577 = vpop.f32.mrf.mxu0
        %v578 = vadd.f32 %v494, %v577
        %v579 = vpop.f32.mrf.mxu0
        %v580 = vadd.f32 %v496, %v579
        %581 = vdwg.mxu0
        %582 = vmatprep.subr.mxu0 0.0
        %583 = vmatpush1.msra.mxu0 0.0
        %584 = vmatprep.subr.mxu0 0.0
        %585 = vmatpush1.msra.mxu0 0.0
        %586 = vmatprep.subr.mxu0 0.0
        %587 = vmatpush1.msra.mxu0 0.0
        %588 = vmatprep.subr.mxu0 0.0
        %589 = vmatpush1.msra.mxu0 0.0
        %590 = vmatprep.subr.mxu0 0.0
        %591 = vmatpush1.msra.mxu0 0.0
        %592 = vmatprep.subr.mxu0 0.0
        %593 = vmatpush1.msra.mxu0 0.0
        %594 = vmatprep.subr.mxu0 0.0
        %595 = vmatpush1.msra.mxu0 0.0
        %596 = vmatprep.subr.mxu0 0.0
        %597 = vmatpush1.msra.mxu0 0.0
        %598 = vmatprep.subr.mxu0 0.0
        %599 = vmatpush1.msra.mxu0 0.0
        %600 = vmatprep.subr.mxu0 0.0
        %601 = vmatpush1.msra.mxu0 0.0
        %602 = vmatprep.subr.mxu0 0.0
        %603 = vmatpush1.msra.mxu0 0.0
        %v604 = vand.u32 %v195, 4294901760
        %v605 = vsub.f32 %v195, %v604
        %v606 = vand.u32 %v605, 4294901760
        %607 = vmatprep.subr.mxu0 %v606
        %v608 = vand.u32 %v192, 4294901760
        %v609 = vsub.f32 %v192, %v608
        %v610 = vand.u32 %v609, 4294901760
        %611 = vmatpush1.msra.mxu0 %v610
        %v612 = vand.u32 %v178, 4294901760
        %v613 = vsub.f32 %v178, %v612
        %v614 = vand.u32 %v613, 4294901760
        %615 = vmatprep.subr.mxu0 %v614
        %v616 = vand.u32 %v177, 4294901760
        %v617 = vsub.f32 %v177, %v616
        %v618 = vand.u32 %v617, 4294901760
        %619 = vmatpush1.msra.mxu0 %v618
        %v620 = vand.u32 %v176, 4294901760
        %v621 = vsub.f32 %v176, %v620
        %v622 = vand.u32 %v621, 4294901760
        %623 = vmatprep.subr.mxu0 %v622
        %v624 = vand.u32 %v175, 4294901760
        %v625 = vsub.f32 %v175, %v624
        %v626 = vand.u32 %v625, 4294901760
        %627 = vmatpush1.msra.mxu0 %v626
        %v628 = vand.u32 %v174, 4294901760
        %v629 = vsub.f32 %v174, %v628
        %v630 = vand.u32 %v629, 4294901760
        %631 = vmatprep.subr.mxu0 %v630
        %v632 = vand.u32 %v173, 4294901760
        %v633 = vsub.f32 %v173, %v632
        %v634 = vand.u32 %v633, 4294901760
        %635 = vmatpush1.msra.mxu0 %v634
        %v636 = vand.u32 %v172, 4294901760
        %v637 = vsub.f32 %v172, %v636
        %v638 = vand.u32 %v637, 4294901760
        %639 = vmatprep.subr.mxu0 %v638
        %v640 = vand.u32 %v171, 4294901760
        %v641 = vsub.f32 %v171, %v640
        %v642 = vand.u32 %v641, 4294901760
        %643 = vmatpush1.msra.mxu0 %v642
        %644 = vmatprep.subr.mxu0 0.0
        %645 = vmatpush2.msra.mxu0 0.0
        %646 = vmatprep.subr.mxu0 0.0
        %647 = vmatpush2.msra.mxu0 0.0
        %648 = vmatprep.subr.mxu0 0.0
        %649 = vmatpush2.msra.mxu0 0.0
        %650 = vmatprep.subr.mxu0 0.0
        %651 = vmatpush2.msra.mxu0 0.0
        %652 = vmatprep.subr.mxu0 0.0
        %653 = vmatpush2.msra.mxu0 0.0
        %654 = vmatprep.subr.mxu0 0.0
        %655 = vmatpush2.msra.mxu0 0.0
        %656 = vmatprep.subr.mxu0 0.0
        %657 = vmatpush2.msra.mxu0 0.0
        %658 = vmatprep.subr.mxu0 0.0
        %659 = vmatpush2.msra.mxu0 0.0
        %660 = vmatprep.subr.mxu0 0.0
        %661 = vmatpush2.msra.mxu0 0.0
        %662 = vmatprep.subr.mxu0 0.0
        %663 = vmatpush2.msra.mxu0 0.0
        %664 = vmatprep.subr.mxu0 0.0
        %665 = vmatpush2.msra.mxu0 0.0
        %666 = vmatprep.subr.mxu0 0.0
        %667 = vmatpush2.msra.mxu0 0.0
        %668 = vmatprep.subr.mxu0 0.0
        %669 = vmatpush2.msra.mxu0 0.0
        %670 = vmatprep.subr.mxu0 0.0
        %671 = vmatpush2.msra.mxu0 0.0
        %672 = vmatprep.subr.mxu0 0.0
        %673 = vmatpush2.msra.mxu0 0.0
        %674 = vmatprep.subr.mxu0 0.0
        %675 = vmatpush2.msra.mxu0 0.0
        %676 = vmatprep.mubr.f32.mxu0 0.0
        %v677 = vand.u32 %v188, 4294901760
        %678 = vmatmul.mubr.f32.gmra.mxu0 %v677
        %v679 = vpop.f32.mrf.mxu0
        %v680 = vadd.f32 %v578, %v679
        %v681 = vpop.f32.mrf.mxu0
        %v682 = vadd.f32 %v580, %v681
        %683 = vdwg.mxu0
        %684 = vmatprep.subr.mxu0 0.0
        %685 = vmatpush1.msra.mxu0 0.0
        %686 = vmatprep.subr.mxu0 0.0
        %687 = vmatpush1.msra.mxu0 0.0
        %688 = vmatprep.subr.mxu0 0.0
        %689 = vmatpush1.msra.mxu0 0.0
        %690 = vmatprep.subr.mxu0 0.0
        %691 = vmatpush1.msra.mxu0 0.0
        %692 = vmatprep.subr.mxu0 0.0
        %693 = vmatpush1.msra.mxu0 0.0
        %694 = vmatprep.subr.mxu0 0.0
        %695 = vmatpush1.msra.mxu0 0.0
        %696 = vmatprep.subr.mxu0 0.0
        %697 = vmatpush1.msra.mxu0 0.0
        %698 = vmatprep.subr.mxu0 0.0
        %699 = vmatpush1.msra.mxu0 0.0
        %700 = vmatprep.subr.mxu0 0.0
        %701 = vmatpush1.msra.mxu0 0.0
        %702 = vmatprep.subr.mxu0 0.0
        %703 = vmatpush1.msra.mxu0 0.0
        %704 = vmatprep.subr.mxu0 0.0
        %705 = vmatpush1.msra.mxu0 0.0
        %v706 = vand.u32 %v195, 4294901760
        %707 = vmatprep.subr.mxu0 %v706
        %v708 = vand.u32 %v192, 4294901760
        %709 = vmatpush1.msra.mxu0 %v708
        %v710 = vand.u32 %v178, 4294901760
        %711 = vmatprep.subr.mxu0 %v710
        %v712 = vand.u32 %v177, 4294901760
        %713 = vmatpush1.msra.mxu0 %v712
        %v714 = vand.u32 %v176, 4294901760
        %715 = vmatprep.subr.mxu0 %v714
        %v716 = vand.u32 %v175, 4294901760
        %717 = vmatpush1.msra.mxu0 %v716
        %v718 = vand.u32 %v174, 4294901760
        %719 = vmatprep.subr.mxu0 %v718
        %v720 = vand.u32 %v173, 4294901760
        %721 = vmatpush1.msra.mxu0 %v720
        %v722 = vand.u32 %v172, 4294901760
        %723 = vmatprep.subr.mxu0 %v722
        %v724 = vand.u32 %v171, 4294901760
        %725 = vmatpush1.msra.mxu0 %v724
        %726 = vmatprep.subr.mxu0 0.0
        %727 = vmatpush2.msra.mxu0 0.0
        %728 = vmatprep.subr.mxu0 0.0
        %729 = vmatpush2.msra.mxu0 0.0
        %730 = vmatprep.subr.mxu0 0.0
        %731 = vmatpush2.msra.mxu0 0.0
        %732 = vmatprep.subr.mxu0 0.0
        %733 = vmatpush2.msra.mxu0 0.0
        %734 = vmatprep.subr.mxu0 0.0
        %735 = vmatpush2.msra.mxu0 0.0
        %736 = vmatprep.subr.mxu0 0.0
        %737 = vmatpush2.msra.mxu0 0.0
        %738 = vmatprep.subr.mxu0 0.0
        %739 = vmatpush2.msra.mxu0 0.0
        %740 = vmatprep.subr.mxu0 0.0
        %741 = vmatpush2.msra.mxu0 0.0
        %742 = vmatprep.subr.mxu0 0.0
        %743 = vmatpush2.msra.mxu0 0.0
        %744 = vmatprep.subr.mxu0 0.0
        %745 = vmatpush2.msra.mxu0 0.0
        %746 = vmatprep.subr.mxu0 0.0
        %747 = vmatpush2.msra.mxu0 0.0
        %748 = vmatprep.subr.mxu0 0.0
        %749 = vmatpush2.msra.mxu0 0.0
        %750 = vmatprep.subr.mxu0 0.0
        %751 = vmatpush2.msra.mxu0 0.0
        %752 = vmatprep.subr.mxu0 0.0
        %753 = vmatpush2.msra.mxu0 0.0
        %754 = vmatprep.subr.mxu0 0.0
        %755 = vmatpush2.msra.mxu0 0.0
        %756 = vmatprep.subr.mxu0 0.0
        %757 = vmatpush2.msra.mxu0 0.0
        %758 = vmatprep.mubr.f32.mxu0 0.0
        %v759 = vand.u32 %v188, 4294901760
        %760 = vmatmul.mubr.f32.gmra.mxu0 %v759
        %v761 = vpop.f32.mrf.mxu0
        %v762 = vadd.f32 %v680, %v761
        %v763 = vpop.f32.mrf.mxu0
        %v764 = vadd.f32 %v682, %v763
        %765 = vdwg.mxu0
        %766 = vst [vmem:[%s163] sm:$0xff] %v762
        %767 = vst [vmem:[%s163 + $0x8] sm:$0xff] %v764
        %s768 = sand.u32 %s93, 1
        %s769 = scalar_lea.sflag [#allocation3], %s768
        %s770 = sand.u32 %s93, 1
        %s771 = smul.addr %s770, 16
        %s772 = scalar_lea.vmem [#allocation2], %s771
        // Predicated region
        $region33: #{tpu_custom_call.1} parent=31 // pred_check
          %p773 = pneg %p103
        $region34: #{tpu_custom_call.1} parent=31 // pred_check_branch
          %775 = sbr.rel (%p773) target = $region36
        $region35: #{tpu_custom_call.1} parent=31 // pred_region
          %s777 = ssub.s32 256, 256
          %778 = vsyncadd %s769, %s777
          %s779 = smul.addr %s17, 2
          %s780 = smul.addr %s779, 128
          %s781 = scalar_lea.hbm %s3, %s780
          %s783 = sshll.u32 %s772, 4
          %s784 = int_to_ptr.vmem [resolvable:$true] %s783
          %786 = dma.vmem_to_hbm [thread:$0]  %s784, 256, %s781, %s769
        $region36: #{tpu_custom_call.1} parent=31 // pred_fallthru
          _
      $region32: #{tpu_custom_call.1} parent=5 // pred_fallthru
        _
      %p787 = scmp.le.s32.totalorder 2, %s12
      // Predicated region
      $region37: #{tpu_custom_call.1} parent=5 // pred_check
        %p788 = pneg %p787
      $region38: #{tpu_custom_call.1} parent=5 // pred_check_branch
        %790 = sbr.rel (%p788) target = $region40
      $region39: #{tpu_custom_call.1} parent=5 // pred_region
        %s791 = ssub.s32 %s12, 2
        // Predicated region
        $region41: #{tpu_custom_call.1} parent=39 // pred_check
          %p792 = pneg %p109
        $region42: #{tpu_custom_call.1} parent=39 // pred_check_branch
          %794 = sbr.rel (%p792) target = $region44
        $region43: #{tpu_custom_call.1} parent=39 // pred_region
          %s795 = sand.u32 %s94, 1
          %s796 = scalar_lea.sflag [#allocation3], %s795
          %s797 = sand.u32 %s94, 1
          %s798 = smul.addr %s797, 16
          %s799 = scalar_lea.vmem [#allocation2], %s798
          %800 = dma.done %s796, 256
        $region44: #{tpu_custom_call.1} parent=39 // pred_fallthru
          _
      $region40: #{tpu_custom_call.1} parent=5 // pred_fallthru
        _
    $region6: #{tpu_custom_call.1} parent=1 // loop_footer
      %s16 = sadd.s32 1, %s12
    $region7: #{tpu_custom_call.1} parent=1 // loop_footer_branch
      %11 = sbr.rel target = $region3
    $region8: #{tpu_custom_call.1} parent=1 // loop_exit
      _
    %801 = vsyncpa [#allocation3], 1
    %s802 = scalar_lea.sflag [#allocation3], 1
    %803 = vsyncpa %s802, 1

</llo_original>
